<compile_context>
chip_gen: v7x
topology: tpu7x:2x2x1
jax: 0.10.0
libtpu: 0.0.40
codegen_flags: <defaults>
</compile_context>

<pallas_src>
import jax
import jax.numpy as jnp
from jax.experimental import pallas as pl
from jax.experimental.pallas import tpu as pltpu


def _round_up(x, m):
    return ((x + m - 1) // m) * m


def _sim_threshold_kernel(x_ref, w1_ref, b1_ref, w2_ref, b2_ref, o_ref):
    # First Linear on the MXU: (TILE_N, 2E)bf16 @ (2E, E)bf16 -> f32 accum.
    h = jnp.dot(x_ref[...], w1_ref[...], preferred_element_type=jnp.float32)
    h = h + b1_ref[...]                      # bias add in f32
    h = jnp.maximum(h, 0.01 * h)             # LeakyReLU (PyTorch default slope)
    # Flatten -> no-op for 2-D activations.  Dropout -> identity at inference.
    # TODO(synk): no train-mode dropout path in this kernel.
    # Second Linear: (TILE_N, E)bf16 @ (E, L_pad)bf16 -> f32 accum.
    out = jnp.dot(h.astype(w2_ref.dtype), w2_ref[...],
                  preferred_element_type=jnp.float32)
    o_ref[...] = (out + b2_ref[...]).astype(o_ref.dtype)


def similarity_threshold(x, w1, b1, w2, b2, *, tile_n=2048):
    """x: (N, 2E); w1: (2E, E); b1: (1, E); w2: (E, L); b2: (1, L) -> (N, L) f32."""
    n, in_dim = x.shape
    e = w1.shape[1]
    labels = w2.shape[1]

    # --- lane-dense output: pad the label axis to a multiple of 128 lanes ---
    l_pad = _round_up(labels, 128)
    if l_pad != labels:
        w2 = jnp.pad(w2, ((0, 0), (0, l_pad - labels)))
        b2 = jnp.pad(b2, ((0, 0), (0, l_pad - labels)))

    # --- batch tiling: large tiles (amortize per-step overhead), 8-aligned ---
    tile_n = max(8, min(tile_n, _round_up(n, 8)))
    tile_n = _round_up(tile_n, 8)
    n_pad = _round_up(n, tile_n)
    if n_pad != n:
        x = jnp.pad(x, ((0, n_pad - n), (0, 0)))

    # --- bf16 matmul operands (halves HBM bytes for x); f32 biases ---
    x_b = x.astype(jnp.bfloat16)
    w1_b = w1.astype(jnp.bfloat16)
    w2_b = w2.astype(jnp.bfloat16)
    b1_f = b1.astype(jnp.float32)
    b2_f = b2.astype(jnp.float32)

    grid = (n_pad // tile_n,)
    out = pl.pallas_call(
        _sim_threshold_kernel,
        out_shape=jax.ShapeDtypeStruct((n_pad, l_pad), jnp.float32),
        grid=grid,
        in_specs=[
            pl.BlockSpec((tile_n, in_dim), lambda i: (i, 0)),  # x: streamed tiles
            pl.BlockSpec((in_dim, e), lambda i: (0, 0)),       # w1: resident
            pl.BlockSpec((1, e), lambda i: (0, 0)),            # b1: resident
            pl.BlockSpec((e, l_pad), lambda i: (0, 0)),        # w2: resident
            pl.BlockSpec((1, l_pad), lambda i: (0, 0)),        # b2: resident
        ],
        out_specs=pl.BlockSpec((tile_n, l_pad), lambda i: (i, 0)),
        compiler_params=pltpu.CompilerParams(
            dimension_semantics=("parallel",)),
    )(x_b, w1_b, b1_f, w2_b, b2_f)

    return out[:n, :labels]


def init_params(key, embed_dim, labels):
    """Deterministic init matching nn.Linear's U(-1/sqrt(fan_in), 1/sqrt(fan_in))."""
    k1, k2, k3, k4 = jax.random.split(key, 4)
    fan1 = 2 * embed_dim
    lim1 = 1.0 / jnp.sqrt(fan1)
    w1 = jax.random.uniform(k1, (fan1, embed_dim), jnp.float32, -lim1, lim1)
    b1 = jax.random.uniform(k2, (1, embed_dim), jnp.float32, -lim1, lim1)
    fan2 = embed_dim
    lim2 = 1.0 / jnp.sqrt(fan2)
    w2 = jax.random.uniform(k3, (fan2, labels), jnp.float32, -lim2, lim2)
    b2 = jax.random.uniform(k4, (1, labels), jnp.float32, -lim2, lim2)
    return w1, b1, w2, b2


def reference(x, w1, b1, w2, b2):
    h = x @ w1 + b1
    h = jnp.maximum(h, 0.01 * h)
    return h @ w2 + b2


if __name__ == "__main__":
    key = jax.random.PRNGKey(0)
    batch, embed_dim, labels = 8, 32, 4

    kx, kp = jax.random.split(key)
    x = jax.random.normal(kx, (batch, 2 * embed_dim), jnp.float32)
    w1, b1, w2, b2 = init_params(kp, embed_dim, labels)

    out = similarity_threshold(x, w1, b1, w2, b2)
    out = jax.block_until_ready(out)
    ref = reference(x, w1, b1, w2, b2)
    assert out.shape == (batch, labels)
    # bf16 matmul operands -> loosened tolerance vs f32 reference.
    assert jnp.allclose(out, ref, atol=5e-2, rtol=5e-2), "mismatch vs JAX reference"

    # Exercise the multi-tile / ragged-batch path (padding + grid > 1).
    batch2 = 300
    x2 = jax.random.normal(jax.random.PRNGKey(1), (batch2, 2 * embed_dim), jnp.float32)
    out2 = jax.block_until_ready(similarity_threshold(x2, w1, b1, w2, b2, tile_n=128))
    ref2 = reference(x2, w1, b1, w2, b2)
    assert out2.shape == (batch2, labels)
    assert jnp.allclose(out2, ref2, atol=5e-2, rtol=5e-2), "mismatch (tiled path)"

    print("KERNEL_OK")
</pallas_src>

<mosaic_0001>
module attributes {stable_mosaic.version = 11 : i64} {
  func.func @_sim_threshold_kernel(%arg0: i32, %arg1: memref<8x64xbf16, #tpu.memory_space<vmem>>, %arg2: memref<64x32xbf16, #tpu.memory_space<vmem>>, %arg3: memref<1x32xf32, #tpu.memory_space<vmem>>, %arg4: memref<32x128xbf16, #tpu.memory_space<vmem>>, %arg5: memref<1x128xf32, #tpu.memory_space<vmem>>, %arg6: memref<8x128xf32, #tpu.memory_space<vmem>>) attributes {dimension_semantics = [#tpu.dimension_semantics<parallel>], iteration_bounds = array<i64: 1>, scalar_prefetch = 0 : i64, scratch_operands = 0 : i64, tpu.core_type = #tpu.core_type<tc>, window_params = [{transform_indices = @transform_0, window_bounds = array<i64: 8, 64>}, {pipeline_mode = #tpu.pipeline_mode<synchronous>, transform_indices = @transform_1, window_bounds = array<i64: 64, 32>}, {pipeline_mode = #tpu.pipeline_mode<synchronous>, transform_indices = @transform_2, window_bounds = array<i64: 1, 32>}, {pipeline_mode = #tpu.pipeline_mode<synchronous>, transform_indices = @transform_3, window_bounds = array<i64: 32, 128>}, {pipeline_mode = #tpu.pipeline_mode<synchronous>, transform_indices = @transform_4, window_bounds = array<i64: 1, 128>}, {transform_indices = @transform_5, window_bounds = array<i64: 8, 128>}]} {
    %c0 = arith.constant 0 : index
    %c0_0 = arith.constant 0 : index
    %0 = vector.load %arg1[%c0, %c0_0] : memref<8x64xbf16, #tpu.memory_space<vmem>>, vector<8x64xbf16>
    %c0_1 = arith.constant 0 : index
    %c0_2 = arith.constant 0 : index
    %1 = vector.load %arg2[%c0_1, %c0_2] : memref<64x32xbf16, #tpu.memory_space<vmem>>, vector<64x32xbf16>
    %cst = arith.constant dense<0.000000e+00> : vector<8x32xf32>
    %2 = tpu.matmul %0, %1, %cst {dimension_numbers = #tpu.dot_dimension_numbers<[1], [0], [0], [1], [0, 0, 1, 1], [], []>} : vector<8x64xbf16>, vector<64x32xbf16>, vector<8x32xf32> -> vector<8x32xf32>
    %c0_3 = arith.constant 0 : index
    %c0_4 = arith.constant 0 : index
    %3 = vector.load %arg3[%c0_3, %c0_4] : memref<1x32xf32, #tpu.memory_space<vmem>>, vector<1x32xf32>
    %4 = vector.broadcast %3 : vector<1x32xf32> to vector<8x32xf32>
    %5 = arith.addf %2, %4 : vector<8x32xf32>
    %cst_5 = arith.constant 0.00999999977 : f32
    %6 = vector.broadcast %cst_5 : f32 to vector<8x32xf32>
    %7 = arith.mulf %6, %5 : vector<8x32xf32>
    %8 = arith.maximumf %5, %7 : vector<8x32xf32>
    %9 = arith.truncf %8 : vector<8x32xf32> to vector<8x32xbf16>
    %c0_6 = arith.constant 0 : index
    %c0_7 = arith.constant 0 : index
    %10 = vector.load %arg4[%c0_6, %c0_7] : memref<32x128xbf16, #tpu.memory_space<vmem>>, vector<32x128xbf16>
    %cst_8 = arith.constant dense<0.000000e+00> : vector<8x128xf32>
    %11 = tpu.matmul %9, %10, %cst_8 {dimension_numbers = #tpu.dot_dimension_numbers<[1], [0], [0], [1], [0, 0, 1, 1], [], []>} : vector<8x32xbf16>, vector<32x128xbf16>, vector<8x128xf32> -> vector<8x128xf32>
    %c0_9 = arith.constant 0 : index
    %c0_10 = arith.constant 0 : index
    %12 = vector.load %arg5[%c0_9, %c0_10] : memref<1x128xf32, #tpu.memory_space<vmem>>, vector<1x128xf32>
    %13 = vector.broadcast %12 : vector<1x128xf32> to vector<8x128xf32>
    %14 = arith.addf %11, %13 : vector<8x128xf32>
    %c0_11 = arith.constant 0 : index
    %c0_12 = arith.constant 0 : index
    %15 = vector.load %arg6[%c0_11, %c0_12] : memref<8x128xf32, #tpu.memory_space<vmem>>, vector<8x128xf32>
    tpu.vector_store %arg6[%c0_11, %c0_12], %14 {strides = array<i32>} : memref<8x128xf32, #tpu.memory_space<vmem>>, vector<8x128xf32>,
    return
  }
  func.func @transform_0(%arg0: i32) -> (i32, i32) {
    %c0_i32 = arith.constant 0 : i32
    %c0_i32_0 = arith.constant 0 : i32
    return %arg0, %c0_i32 : i32, i32
  }
  func.func @transform_1(%arg0: i32) -> (i32, i32) {
    %c0_i32 = arith.constant 0 : i32
    %c0_i32_0 = arith.constant 0 : i32
    %c0_i32_1 = arith.constant 0 : i32
    return %c0_i32, %c0_i32_0 : i32, i32
  }
  func.func @transform_2(%arg0: i32) -> (i32, i32) {
    %c0_i32 = arith.constant 0 : i32
    %c0_i32_0 = arith.constant 0 : i32
    %c0_i32_1 = arith.constant 0 : i32
    return %c0_i32, %c0_i32_0 : i32, i32
  }
  func.func @transform_3(%arg0: i32) -> (i32, i32) {
    %c0_i32 = arith.constant 0 : i32
    %c0_i32_0 = arith.constant 0 : i32
    %c0_i32_1 = arith.constant 0 : i32
    return %c0_i32, %c0_i32_0 : i32, i32
  }
  func.func @transform_4(%arg0: i32) -> (i32, i32) {
    %c0_i32 = arith.constant 0 : i32
    %c0_i32_0 = arith.constant 0 : i32
    %c0_i32_1 = arith.constant 0 : i32
    return %c0_i32, %c0_i32_0 : i32, i32
  }
  func.func @transform_5(%arg0: i32) -> (i32, i32) {
    %c0_i32 = arith.constant 0 : i32
    %c0_i32_0 = arith.constant 0 : i32
    return %arg0, %c0_i32 : i32, i32
  }
}

</mosaic_0001>

<llo_original>
// kernel: tpu_custom_call.1
$region0: #{tpu_custom_call.1}
  #allocation0 [shape = 'u32[]', space=smem, size = 0x4, offset = 0x4, fixed_abs, tag = 'smem constant byte address 0x4 - core index']
  #allocation1 [shape = 'u32[144,128]{1,0:T(1,128)}', space=vmem, size = 0x12000, scoped, tag = 'internal scratch']
  %s0 = inlined_call_operand.vmem [shape: bf16[8,64], index: 0, kind: input, shape index: {}]
  %s1 = inlined_call_operand.vmem [shape: bf16[64,32], index: 1, kind: input, shape index: {}]
  %s2 = inlined_call_operand.vmem [shape: f32[1,32], index: 2, kind: input, shape index: {}]
  %s3 = inlined_call_operand.vmem [shape: bf16[32,128], index: 3, kind: input, shape index: {}]
  %s4 = inlined_call_operand.vmem [shape: f32[1,128], index: 4, kind: input, shape index: {}]
  %s5 = inlined_call_operand.hbm [shape: f32[8,128], index: 5, kind: output, shape index: {}]
  %s6 = sld [smem:[#allocation0]]
  $region30: #{tpu_custom_call.1} parent=0
    _
  %s8 = ssub.s32 1, %s6
  %s9 = scalar_select 0, %s8, %s6
  $region1: #{tpu_custom_call.1} parent=0
    #allocation2 [shape = 'u8[4096]{0}', space=vmem, size = 0x1000, scoped, tag = 'output window, operand 0, single buffered']
    #allocation3 [shape = 's32[1]{0}', space=sflag, size = 0x4, scoped, tag = 'scoped memory for tpu_custom_call.1']
    %10 = vsyncpa [#allocation3], 0
    // Predicated region
    $region2: #{tpu_custom_call.1} parent=1 // pred_check
      _
    $region3: #{tpu_custom_call.1} parent=1 // pred_check_branch
      %12 = sbr.rel (0) target = $region5
    $region4: #{tpu_custom_call.1} parent=1 // pred_region
      _
    $region5: #{tpu_custom_call.1} parent=1 // pred_fallthru
      _
    // Predicated region
    $region6: #{tpu_custom_call.1} parent=1 // pred_check
      _
    $region7: #{tpu_custom_call.1} parent=1 // pred_check_branch
      %14 = sbr.rel (0) target = $region9
    $region8: #{tpu_custom_call.1} parent=1 // pred_region
      _
    $region9: #{tpu_custom_call.1} parent=1 // pred_fallthru
      _
    // Predicated region
    $region10: #{tpu_custom_call.1} parent=1 // pred_check
      _
    $region11: #{tpu_custom_call.1} parent=1 // pred_check_branch
      %16 = sbr.rel (0) target = $region13
    $region12: #{tpu_custom_call.1} parent=1 // pred_region
      _
    $region13: #{tpu_custom_call.1} parent=1 // pred_fallthru
      _
    // Predicated region
    $region14: #{tpu_custom_call.1} parent=1 // pred_check
      _
    $region15: #{tpu_custom_call.1} parent=1 // pred_check_branch
      %18 = sbr.rel (0) target = $region17
    $region16: #{tpu_custom_call.1} parent=1 // pred_region
      _
    $region17: #{tpu_custom_call.1} parent=1 // pred_fallthru
      _
    // Predicated region
    $region18: #{tpu_custom_call.1} parent=1 // pred_check
      _
    $region19: #{tpu_custom_call.1} parent=1 // pred_check_branch
      %20 = sbr.rel (0) target = $region21
    $region20: #{tpu_custom_call.1} parent=1 // pred_region
      _
    $region21: #{tpu_custom_call.1} parent=1 // pred_fallthru
      _
    %v22 = vld [vmem:[%s0] sm:$0xf]
    %v23 = vld [vmem:[%s1] sm:$0xf]
    %v24 = vld [vmem:[%s1 + $0x4] sm:$0xf]
    %v25 = vld [vmem:[%s1 + $0x8] sm:$0xf]
    %v26 = vld [vmem:[%s1 + $0xc] sm:$0xf]
    %v27 = vld [vmem:[%s1 + $0x10] sm:$0xf]
    %v28 = vld [vmem:[%s1 + $0x14] sm:$0xf]
    %v29 = vld [vmem:[%s1 + $0x18] sm:$0xf]
    %v30 = vld [vmem:[%s1 + $0x1c] sm:$0xf]
    %v31 = vld [vmem:[%s2] sm:$0x1]
    %v33 = vlaneseq
    %v34 = vshrl.u32 %v33, 7
    %v35 = vsub.s32 0, %v34
    %v36 = vrot.slane %v31, %v35
    %v46 = vunpack.c.l.b16 %v23
    %v47 = vunpack.c.l.b16 %v24
    %v48 = vunpack.c.l.b16 %v25
    %v49 = vunpack.c.l.b16 %v26
    %v50 = vunpack.c.l.b16 %v27
    %v51 = vunpack.c.l.b16 %v28
    %v52 = vunpack.c.l.b16 %v29
    %v53 = vunpack.c.l.b16 %v30
    %v54 = vpack.c.b16 %v47, %v46
    %v55 = vpack.c.b16 %v49, %v48
    %v56 = vpack.c.b16 %v51, %v50
    %v57 = vpack.c.b16 %v53, %v52
    %vm62 = vcmask 523264
    %v64 = vsel %vm62, %v22, 0
    %66 = vmatprep.subr.bf16.mxu0 0
    %67 = vmatpush1.bf16.msra.mxu0 %v54
    %68 = vmatprep.subr.bf16.mxu0 0
    %69 = vmatpush1.bf16.msra.mxu0 %v55
    %70 = vmatprep.subr.bf16.mxu0 0
    %71 = vmatpush1.bf16.msra.mxu0 %v56
    %72 = vmatprep.subr.bf16.mxu0 0
    %73 = vmatpush1.bf16.msra.mxu0 %v57
    %74 = vmatprep.subr.bf16.mxu0 0
    %75 = vmatpush1.bf16.msra.mxu0 0
    %76 = vmatprep.subr.bf16.mxu0 0
    %77 = vmatpush1.bf16.msra.mxu0 0
    %78 = vmatprep.subr.bf16.mxu0 0
    %79 = vmatpush1.bf16.msra.mxu0 0
    %80 = vmatprep.subr.bf16.mxu0 0
    %81 = vmatpush1.bf16.msra.mxu0 0
    %82 = vmatprep.subr.bf16.mxu0 0
    %83 = vmatpush1.bf16.msra.mxu0 0
    %84 = vmatprep.subr.bf16.mxu0 0
    %85 = vmatpush1.bf16.msra.mxu0 0
    %86 = vmatprep.subr.bf16.mxu0 0
    %87 = vmatpush1.bf16.msra.mxu0 0
    %88 = vmatprep.subr.bf16.mxu0 0
    %89 = vmatpush1.bf16.msra.mxu0 0
    %90 = vmatprep.subr.bf16.mxu0 0
    %91 = vmatpush1.bf16.msra.mxu0 0
    %92 = vmatprep.subr.bf16.mxu0 0
    %93 = vmatpush1.bf16.msra.mxu0 0
    %94 = vmatprep.subr.bf16.mxu0 0
    %95 = vmatpush1.bf16.msra.mxu0 0
    %96 = vmatprep.subr.bf16.mxu0 0
    %97 = vmatpush1.bf16.msra.mxu0 0
    %98 = vmatprep.mubr.bf16.mxu0 0
    %99 = vmatmul.mubr.bf16.gmra.mrb[0].mxu0 %v64
    %v100 = vpop.f32.mrb[0].mxu0
    %v101 = vadd.f32 %v36, %v100
    %v102 = vpop.f32.mrb[0].mxu0
    %v103 = vpop.f32.mrb[0].mxu0
    %v104 = vpop.f32.mrb[0].mxu0
    %105 = vdwg.mxu0
    %v106 = vmul.f32 %v101, 0.01
    %v107 = vmax.f32 %v101, %v106
    %v108 = vpack.c.bf16 %v107, %v107
    %v109 = vld [vmem:[%s3] sm:$0xf]
    %v110 = vld [vmem:[%s3 + $0x4] sm:$0xf]
    %v111 = vld [vmem:[%s3 + $0x8] sm:$0xf]
    %v112 = vld [vmem:[%s3 + $0xc] sm:$0xf]
    %v113 = vld [vmem:[%s4] sm:$0x1]
    %v115 = vlaneseq
    %v116 = vshrl.u32 %v115, 7
    %v117 = vsub.s32 0, %v116
    %v118 = vrot.slane %v113, %v117
    %v124 = vunpack.c.l.b16 %v109
    %v125 = vunpack.c.l.b16 %v110
    %v126 = vunpack.c.l.b16 %v111
    %v127 = vunpack.c.l.b16 %v112
    %v128 = vpack.c.b16 %v125, %v124
    %v129 = vpack.c.b16 %v127, %v126
    %vm132 = vcmask 261120
    %v134 = vsel %vm132, %v108, 0
    %136 = vmatprep.subr.bf16.mxu0 0
    %137 = vmatpush1.bf16.msra.mxu0 %v128
    %138 = vmatprep.subr.bf16.mxu0 0
    %139 = vmatpush1.bf16.msra.mxu0 %v129
    %140 = vmatprep.subr.bf16.mxu0 0
    %141 = vmatpush1.bf16.msra.mxu0 0
    %142 = vmatprep.subr.bf16.mxu0 0
    %143 = vmatpush1.bf16.msra.mxu0 0
    %144 = vmatprep.subr.bf16.mxu0 0
    %145 = vmatpush1.bf16.msra.mxu0 0
    %146 = vmatprep.subr.bf16.mxu0 0
    %147 = vmatpush1.bf16.msra.mxu0 0
    %148 = vmatprep.subr.bf16.mxu0 0
    %149 = vmatpush1.bf16.msra.mxu0 0
    %150 = vmatprep.subr.bf16.mxu0 0
    %151 = vmatpush1.bf16.msra.mxu0 0
    %152 = vmatprep.subr.bf16.mxu0 0
    %153 = vmatpush1.bf16.msra.mxu0 0
    %154 = vmatprep.subr.bf16.mxu0 0
    %155 = vmatpush1.bf16.msra.mxu0 0
    %156 = vmatprep.subr.bf16.mxu0 0
    %157 = vmatpush1.bf16.msra.mxu0 0
    %158 = vmatprep.subr.bf16.mxu0 0
    %159 = vmatpush1.bf16.msra.mxu0 0
    %160 = vmatprep.subr.bf16.mxu0 0
    %161 = vmatpush1.bf16.msra.mxu0 0
    %162 = vmatprep.subr.bf16.mxu0 0
    %163 = vmatpush1.bf16.msra.mxu0 0
    %164 = vmatprep.subr.bf16.mxu0 0
    %165 = vmatpush1.bf16.msra.mxu0 0
    %166 = vmatprep.subr.bf16.mxu0 0
    %167 = vmatpush1.bf16.msra.mxu0 0
    %168 = vmatprep.mubr.bf16.mxu0 0
    %169 = vmatmul.mubr.bf16.gmra.mrb[0].mxu0 %v134
    %v170 = vpop.f32.mrb[0].mxu0
    %v171 = vadd.f32 %v118, %v170
    %v172 = vpop.f32.mrb[0].mxu0
    %v173 = vpop.f32.mrb[0].mxu0
    %v174 = vpop.f32.mrb[0].mxu0
    %175 = vdwg.mxu0
    %176 = vst [vmem:[#allocation2] sm:$0xff] %v171
    // Predicated region
    $region22: #{tpu_custom_call.1} parent=1 // pred_check
      _
    $region23: #{tpu_custom_call.1} parent=1 // pred_check_branch
      %178 = sbr.rel (0) target = $region25
    $region24: #{tpu_custom_call.1} parent=1 // pred_region
      %s180 = ssub.s32 128, 128
      %181 = vsyncadd [#allocation3], %s180
      %s183 = sshll.u32 [#allocation2], 4
      %s184 = int_to_ptr.vmem [resolvable:$true] %s183
      %186 = dma.vmem_to_hbm [thread:$0]  %s184, 128, %s5, [#allocation3]
    $region25: #{tpu_custom_call.1} parent=1 // pred_fallthru
      _
    // Predicated region
    $region26: #{tpu_custom_call.1} parent=1 // pred_check
      _
    $region27: #{tpu_custom_call.1} parent=1 // pred_check_branch
      %188 = sbr.rel (0) target = $region29
    $region28: #{tpu_custom_call.1} parent=1 // pred_region
      %189 = dma.done [#allocation3], 128
    $region29: #{tpu_custom_call.1} parent=1 // pred_fallthru
      _
    %190 = vsyncpa [#allocation3], 1

</llo_original>
